<compile_context>
chip_gen: v7x
topology: tpu7x:2x2x1
jax: 0.10.0
libtpu: 0.0.40
codegen_flags: <defaults>
</compile_context>

<pallas_src>
import numpy as np
import jax
import jax.numpy as jnp
from jax import lax
from jax.experimental import pallas as pl
from jax.experimental.pallas import tpu as pltpu

# ----------------------------- config ---------------------------------------
HIDDEN   = 32            # opt.hidden_dim
D        = 2 * HIDDEN    # GCN in/out features
POL      = 3             # opt.polarities_dim
EDGE_SZ  = 16            # opt.edge_size
VOCAB    = 20
EMB_DIM  = 768
K_HOPS   = 3             # simpleGraphConvolutionalignment.K
LN_EPS   = 1e-5

# ----------------------------- Pallas kernel --------------------------------

def gcn_align_kernel(text_ref, adjn_ref, kbias_ref, rmask_ref,
                     gcw_ref, alw_ref, p_ref, out_ref):
    """Fused K-hop GCN + LayerNorm residual + self-alignment attention.

    One grid step == one batch sample (grid=(B,), "parallel"); every matmul
    is a plain 2-D MXU call with bf16 operands / f32 accumulation.

    text_ref  : (1, N, D)   bf16 node features (LSTM output)
    adjn_ref  : (1, N, N)   bf16 pre-normalized adjacency clamp(a1+a2)/(rowsum+1)
    kbias_ref : (1, 1, N)   f32 additive key mask  (textmask-1)*1e20
    rmask_ref : (1, N, 1)   f32 query-row mask (textmask)
    gcw_ref   : (D, D)      bf16 gc.linear weight, PRE-TRANSPOSED
    alw_ref   : (D, D)      bf16 align.linear weight, PRE-TRANSPOSED
    p_ref     : (4, 1, D)   f32 packed [gc_bias, ln_gamma, ln_beta, align_bias]
    out_ref   : (1, N, 2D)  f32 lane-dense slab [aligned | gcn]
    """
    x     = text_ref[0].astype(jnp.float32)    # (N, D) residual stream in f32
    adj   = adjn_ref[0]                        # (N, N) bf16
    kbias = kbias_ref[0]                       # (1, N) f32
    rmask = rmask_ref[0]                       # (N, 1) f32
    gcw   = gcw_ref[...]                       # (D, D) bf16
    alw   = alw_ref[...]                       # (D, D) bf16
    p     = p_ref[...]                         # (4, 1, D) f32
    gc_bias, gamma, beta, al_bias = p[0], p[1], p[2], p[3]   # each (1, D)

    # ---- K-hop GCN with LayerNorm residual (dropout = identity) ----
    # Reference: out = relu(adj @ (x @ W) / denom) + bias; LN(out) + residual.
    # Adjacency is pre-normalized outside (relu commutes with positive scale).
    output = x
    for _ in range(K_HOPS):
        outs = output
        teout = jnp.dot(output.astype(jnp.bfloat16), gcw,
                        preferred_element_type=jnp.float32)        # (N, D)
        h = jnp.dot(adj, teout.astype(jnp.bfloat16),
                    preferred_element_type=jnp.float32)            # (N, D)
        h = jnp.maximum(h, 0.0) + gc_bias
        mean = jnp.mean(h, axis=-1, keepdims=True)
        var = jnp.mean((h - mean) ** 2, axis=-1, keepdims=True)
        hn = (h - mean) * lax.rsqrt(var + LN_EPS) * gamma + beta
        output = hn + outs

    # ---- self-alignment attention: softmax((y@W) y^T + keymask) @ y ----
    out_bf = output.astype(jnp.bfloat16)
    q = jnp.dot(out_bf, alw, preferred_element_type=jnp.float32)   # (N, D)
    logits = lax.dot_general(q.astype(jnp.bfloat16), out_bf,
                             (((1,), (1,)), ((), ())),
                             preferred_element_type=jnp.float32)   # (N, N)
    logits = logits + kbias
    logits = logits - jnp.max(logits, axis=-1, keepdims=True)
    e = jnp.exp(logits)
    probs = e / jnp.sum(e, axis=-1, keepdims=True)                 # exact softmax
    aligned = jnp.dot(probs.astype(jnp.bfloat16), out_bf,
                      preferred_element_type=jnp.float32)          # (N, D)
    aligned = aligned * rmask + al_bias                            # row mask + bias

    # Single lane-dense (N, 2D) = (N, 128) store: [aligned | gcn].
    out_ref[0] = jnp.concatenate([aligned, output], axis=-1).astype(out_ref.dtype)


def run_gcn_align(text_bf, adj_norm, key_bias, row_mask, gc_w_t, align_w_t, p_slab):
    """grid=(B,) parallel over samples; weights stay VMEM-resident (constant map)."""
    B, N, Dd = text_bf.shape
    return pl.pallas_call(
        gcn_align_kernel,
        grid=(B,),
        in_specs=[
            pl.BlockSpec((1, N, Dd), lambda b: (b, 0, 0)),   # text (bf16)
            pl.BlockSpec((1, N, N), lambda b: (b, 0, 0)),    # normalized adjacency (bf16)
            pl.BlockSpec((1, 1, N), lambda b: (b, 0, 0)),    # additive key mask
            pl.BlockSpec((1, N, 1), lambda b: (b, 0, 0)),    # query-row mask
            pl.BlockSpec((Dd, Dd), lambda b: (0, 0)),        # gc weight^T (bf16)
            pl.BlockSpec((Dd, Dd), lambda b: (0, 0)),        # align weight^T (bf16)
            pl.BlockSpec((4, 1, Dd), lambda b: (0, 0, 0)),   # bias/gamma/beta/align_bias
        ],
        out_specs=pl.BlockSpec((1, N, 2 * Dd), lambda b: (b, 0, 0)),
        out_shape=jax.ShapeDtypeStruct((B, N, 2 * Dd), jnp.float32),
        compiler_params=pltpu.CompilerParams(
            dimension_semantics=("parallel",),       # megacore on v7x; no-op on v5e/v6e
            vmem_limit_bytes=32 * 1024 * 1024),      # guard before scaling B/N on v7x
    )(text_bf, adj_norm, key_bias, row_mask, gc_w_t, align_w_t, p_slab)


# ----------------------------- plain-JAX glue --------------------------------

def _lstm_dir(x, lengths, w_ih, w_hh, b_ih, b_hh, reverse):
    """Single-direction LSTM with variable lengths (pack_padded semantics)."""
    B, T, _ = x.shape
    H = w_hh.shape[1]
    # Input projection hoisted out of the sequential scan: one big matmul
    # instead of T tiny matmuls on the critical path.
    xproj = jnp.einsum('bti,gi->btg', x, w_ih) + b_ih + b_hh   # (B, T, 4H)
    ts = jnp.arange(T)
    xs = jnp.transpose(xproj, (1, 0, 2))        # (T, B, 4H)
    if reverse:
        ts = ts[::-1]
        xs = xs[::-1]
    valid = (ts[:, None] < lengths[None, :])[:, :, None]   # (T, B, 1)

    def cell(carry, inp):
        h, c = carry
        xg, v = inp
        gates = xg + h @ w_hh.T
        i, f, g, o = jnp.split(gates, 4, axis=-1)
        i = jax.nn.sigmoid(i)
        f = jax.nn.sigmoid(f)
        g = jnp.tanh(g)
        o = jax.nn.sigmoid(o)
        c_new = f * c + i * g
        h_new = o * jnp.tanh(c_new)
        h2 = jnp.where(v, h_new, h)
        c2 = jnp.where(v, c_new, c)
        out = jnp.where(v, h_new, 0.0)
        return (h2, c2), out

    init = (jnp.zeros((B, H), jnp.float32), jnp.zeros((B, H), jnp.float32))
    (h_fin, _), outs = lax.scan(cell, init, (xs, valid))
    outs = jnp.transpose(outs, (1, 0, 2))
    if reverse:
        outs = outs[:, ::-1, :]
    return outs, h_fin


def bilstm(x, lengths, p):
    out_f, h_f = _lstm_dir(x, lengths, p["w_ih_f"], p["w_hh_f"],
                           p["b_ih_f"], p["b_hh_f"], reverse=False)
    out_b, h_b = _lstm_dir(x, lengths, p["w_ih_b"], p["w_hh_b"],
                           p["b_ih_b"], p["b_hh_b"], reverse=True)
    out = jnp.concatenate([out_f, out_b], axis=-1)      # (B, T, 2H)
    hout = jnp.stack([h_f, h_b], axis=0)                # (2, B, H)
    return out, hout


def length2mask(length, maxlength):
    return (jnp.arange(maxlength)[None, :] < length[:, None]).astype(jnp.float32)


def _span_select_matrix(span_lists, n_rows, n_cols):
    """(B, n_rows, n_cols) selection matrix: M[i,j,k]=1 iff span j of sample i
    covers position k.  Built host-side (span lists are static Python data)."""
    B = len(span_lists)
    M = np.zeros((B, n_rows, n_cols), np.float32)
    for i, spans in enumerate(span_lists):
        for j, (s, e) in enumerate(spans):
            M[i, j, s:e] = 1.0
    return jnp.asarray(M)


def asbigcn_forward(params, inputs):
    (text_indices, span_indices, tran_indices, adj1, adj2, edge1, edge2) = inputs
    B, S = text_indices.shape

    # --- token encoder (stand-in for self.bert, see TODO at top) ---
    outputs = params["embed"][text_indices]              # (B, S, 768)
    output = outputs[:, 1:, :]                           # drop [CLS]-like token

    # --- span sum over tran_indices, vectorized as a selection matmul ---
    max_len = max(len(item) for item in tran_indices)
    text_len = jnp.array([len(item) for item in tran_indices], jnp.int32)
    M_tran = _span_select_matrix(tran_indices, max_len, S - 1)   # (B, N, S-1)
    tmps = jnp.einsum('bjs,bsd->bjd', M_tran, output)            # (B, N, 768)

    # --- DynamicLSTM (variable length bi-LSTM), dropout = identity ---
    text, hout = bilstm(tmps, text_len, params["lstm"])  # (B, N, 2H), (2, B, H)
    x = text
    hout = jnp.transpose(hout, (1, 0, 2)).reshape(B, -1) # (B, 2H)

    textmask = length2mask(text_len, max_len)            # (B, N)

    # --- pre-combined + pre-normalized adjacency (adj[adj>=1]=1; / rowsum+1) ---
    adj = adj1 + adj2
    adj = jnp.where(adj >= 1.0, 1.0, adj)
    denom = jnp.sum(adj, axis=-1, keepdims=True) + 1.0
    adj_norm = (adj / denom).astype(jnp.bfloat16)        # relu commutes w/ scale

    # NOTE: reference computes edge_vocab(edge1+edge2) but never uses the
    # result; dead code omitted (edge1/edge2 remain in the input signature).

    # --- masks shipped in their kernel-ready forms ---
    key_bias = ((textmask - 1.0) * 1e20)[:, None, :]     # (B, 1, N) additive key mask
    row_mask = textmask[:, :, None]                      # (B, N, 1)

    # --- fused GCN + alignment (single Pallas call, grid over batch) ---
    text_out = run_gcn_align(
        text.astype(jnp.bfloat16), adj_norm, key_bias, row_mask,
        params["gc_lin_w_t"], params["align_lin_w_t"], params["gc_align_slab"])
    # text_out: (B, N, 4H) lane-dense slab == cat([aligned, gcn_out], -1)

    # --- span pooling over span_indices, vectorized (max + sum) ---
    spanlen = max(len(item) for item in span_indices)
    M_span = _span_select_matrix(span_indices, spanlen, max_len)  # (B, P, N)
    tmp1 = jnp.einsum('bjn,bnd->bjd', M_span, x)                  # sum-pool (B,P,2H)
    m = (M_span > 0)[:, :, :, None]                               # (B, P, N, 1)
    tmp = jnp.max(jnp.where(m, text_out[:, None, :, :], -jnp.inf), axis=2)
    tmp = jnp.where(jnp.any(m, axis=2), tmp, 0.0)                 # (B, P, 4H)

    feat = jnp.concatenate([hout, tmp[:, 0, :], tmp1[:, 0, :]], axis=-1)  # (B, 8H)
    # final fc kept in plain XLA (POL=3 output is lane-sparse in Pallas;
    # a kernel here would be pure launch overhead)
    logits = feat @ params["fc_w_t"] + params["fc_b"]             # (B, POL)
    return logits


# ----------------------------- params / inputs -------------------------------

def init_params(key):
    ks = jax.random.split(key, 20)
    n = lambda k, s, sc=0.05: (jax.random.normal(k, s, jnp.float32) * sc)
    gc_bias = n(ks[3], (1, D))
    align_bias = n(ks[5], (1, D))
    params = {
        "embed": n(ks[0], (VOCAB, EMB_DIM)),
        # gc: linear (no bias) in bf16; bias + LayerNorm + align bias packed
        # into one (4,1,D) f32 slab consumed by the kernel.
        "gc_lin_w_t": n(ks[2], (D, D)).T.astype(jnp.bfloat16),   # pre-transposed
        "align_lin_w_t": n(ks[4], (D, D)).T.astype(jnp.bfloat16),
        "gc_align_slab": jnp.stack(
            [gc_bias,
             jnp.ones((1, D), jnp.float32),    # LN gamma
             jnp.zeros((1, D), jnp.float32),   # LN beta
             align_bias],
            axis=0),                           # (4, 1, D)
        # fc
        "fc_w_t": n(ks[6], (POL, 8 * HIDDEN)).T,
        "fc_b": n(ks[7], (1, POL)),
        # bi-LSTM (768 -> HIDDEN, bidirectional)
        "lstm": {
            "w_ih_f": n(ks[8], (4 * HIDDEN, EMB_DIM)),
            "w_hh_f": n(ks[9], (4 * HIDDEN, HIDDEN)),
            "b_ih_f": n(ks[10], (4 * HIDDEN,)),
            "b_hh_f": n(ks[11], (4 * HIDDEN,)),
            "w_ih_b": n(ks[12], (4 * HIDDEN, EMB_DIM)),
            "w_hh_b": n(ks[13], (4 * HIDDEN, HIDDEN)),
            "b_ih_b": n(ks[14], (4 * HIDDEN,)),
            "b_hh_b": n(ks[15], (4 * HIDDEN,)),
        },
    }
    return params


if __name__ == "__main__":
    key = jax.random.PRNGKey(0)
    pkey, ikey = jax.random.split(key)
    params = init_params(pkey)

    B, S, N = 2, 10, 8
    iks = jax.random.split(ikey, 6)
    text_indices = jax.random.randint(iks[0], (B, S), 1, VOCAB, jnp.int32)
    adj1 = jax.random.bernoulli(iks[1], 0.4, (B, N, N)).astype(jnp.float32)
    adj2 = jax.random.bernoulli(iks[2], 0.4, (B, N, N)).astype(jnp.float32)
    edge1 = jax.random.randint(iks[3], (B, N, N), 0, EDGE_SZ // 2, jnp.int32)
    edge2 = jax.random.randint(iks[4], (B, N, N), 0, EDGE_SZ // 2, jnp.int32)

    # python-list span structures (as in the reference dataloader)
    tran_indices = [
        [(0, 1), (1, 2), (2, 3), (3, 4), (4, 5), (5, 6), (6, 8), (8, 9)],  # len 8
        [(0, 2), (2, 3), (3, 4), (4, 6), (6, 7), (7, 9)],                  # len 6
    ]
    span_indices = [
        [(2, 5)],
        [(1, 3), (4, 6)],
    ]

    inputs = (text_indices, span_indices, tran_indices, adj1, adj2, edge1, edge2)
    logits = asbigcn_forward(params, inputs)
    logits = jax.block_until_ready(logits)
    assert logits.shape == (B, POL) and logits.dtype == jnp.float32
    assert bool(jnp.all(jnp.isfinite(logits)))
    print("KERNEL_OK")
</pallas_src>

<mosaic_0001>
module attributes {stable_mosaic.version = 11 : i64} {
  func.func @gcn_align_kernel(%arg0: i32, %arg1: memref<1x8x64xbf16, #tpu.memory_space<vmem>>, %arg2: memref<1x8x8xbf16, #tpu.memory_space<vmem>>, %arg3: memref<1x1x8xf32, #tpu.memory_space<vmem>>, %arg4: memref<1x8x1xf32, #tpu.memory_space<vmem>>, %arg5: memref<64x64xbf16, #tpu.memory_space<vmem>>, %arg6: memref<64x64xbf16, #tpu.memory_space<vmem>>, %arg7: memref<4x1x64xf32, #tpu.memory_space<vmem>>, %arg8: memref<1x8x128xf32, #tpu.memory_space<vmem>>) attributes {dimension_semantics = [#tpu.dimension_semantics<parallel>], iteration_bounds = array<i64: 2>, scalar_prefetch = 0 : i64, scratch_operands = 0 : i64, tpu.core_type = #tpu.core_type<tc>, window_params = [{transform_indices = @transform_0, window_bounds = array<i64: 1, 8, 64>}, {transform_indices = @transform_1, window_bounds = array<i64: 1, 8, 8>}, {transform_indices = @transform_2, window_bounds = array<i64: 1, 1, 8>}, {transform_indices = @transform_3, window_bounds = array<i64: 1, 8, 1>}, {pipeline_mode = #tpu.pipeline_mode<synchronous>, transform_indices = @transform_4, window_bounds = array<i64: 64, 64>}, {pipeline_mode = #tpu.pipeline_mode<synchronous>, transform_indices = @transform_5, window_bounds = array<i64: 64, 64>}, {pipeline_mode = #tpu.pipeline_mode<synchronous>, transform_indices = @transform_6, window_bounds = array<i64: 4, 1, 64>}, {transform_indices = @transform_7, window_bounds = array<i64: 1, 8, 128>}]} {
    %c0 = arith.constant 0 : index
    %c0_0 = arith.constant 0 : index
    %c0_1 = arith.constant 0 : index
    %0 = vector.load %arg1[%c0, %c0_0, %c0_1] : memref<1x8x64xbf16, #tpu.memory_space<vmem>>, vector<1x8x64xbf16>
    %1 = vector.shape_cast %0 : vector<1x8x64xbf16> to vector<8x64xbf16>
    %2 = arith.extf %1 : vector<8x64xbf16> to vector<8x64xf32>
    %c0_2 = arith.constant 0 : index
    %c0_3 = arith.constant 0 : index
    %c0_4 = arith.constant 0 : index
    %3 = vector.load %arg2[%c0_2, %c0_3, %c0_4] : memref<1x8x8xbf16, #tpu.memory_space<vmem>>, vector<1x8x8xbf16>
    %4 = vector.shape_cast %3 : vector<1x8x8xbf16> to vector<8x8xbf16>
    %c0_5 = arith.constant 0 : index
    %c0_6 = arith.constant 0 : index
    %c0_7 = arith.constant 0 : index
    %5 = vector.load %arg3[%c0_5, %c0_6, %c0_7] : memref<1x1x8xf32, #tpu.memory_space<vmem>>, vector<1x1x8xf32>
    %6 = vector.shape_cast %5 : vector<1x1x8xf32> to vector<1x8xf32>
    %c0_8 = arith.constant 0 : index
    %c0_9 = arith.constant 0 : index
    %c0_10 = arith.constant 0 : index
    %7 = vector.load %arg4[%c0_8, %c0_9, %c0_10] : memref<1x8x1xf32, #tpu.memory_space<vmem>>, vector<1x8x1xf32>
    %8 = vector.shape_cast %7 : vector<1x8x1xf32> to vector<8x1xf32>
    %c0_11 = arith.constant 0 : index
    %c0_12 = arith.constant 0 : index
    %9 = vector.load %arg5[%c0_11, %c0_12] : memref<64x64xbf16, #tpu.memory_space<vmem>>, vector<64x64xbf16>
    %c0_13 = arith.constant 0 : index
    %c0_14 = arith.constant 0 : index
    %10 = vector.load %arg6[%c0_13, %c0_14] : memref<64x64xbf16, #tpu.memory_space<vmem>>, vector<64x64xbf16>
    %c0_15 = arith.constant 0 : index
    %c0_16 = arith.constant 0 : index
    %c0_17 = arith.constant 0 : index
    %11 = vector.load %arg7[%c0_15, %c0_16, %c0_17] : memref<4x1x64xf32, #tpu.memory_space<vmem>>, vector<4x1x64xf32>
    %12 = vector.extract_strided_slice %11 {offsets = [0, 0, 0], sizes = [1, 1, 64], strides = [1, 1, 1]} : vector<4x1x64xf32> to vector<1x1x64xf32>
    %13 = vector.shape_cast %12 : vector<1x1x64xf32> to vector<1x64xf32>
    %14 = vector.extract_strided_slice %11 {offsets = [1, 0, 0], sizes = [1, 1, 64], strides = [1, 1, 1]} : vector<4x1x64xf32> to vector<1x1x64xf32>
    %15 = vector.shape_cast %14 : vector<1x1x64xf32> to vector<1x64xf32>
    %16 = vector.extract_strided_slice %11 {offsets = [2, 0, 0], sizes = [1, 1, 64], strides = [1, 1, 1]} : vector<4x1x64xf32> to vector<1x1x64xf32>
    %17 = vector.shape_cast %16 : vector<1x1x64xf32> to vector<1x64xf32>
    %18 = vector.extract_strided_slice %11 {offsets = [3, 0, 0], sizes = [1, 1, 64], strides = [1, 1, 1]} : vector<4x1x64xf32> to vector<1x1x64xf32>
    %19 = vector.shape_cast %18 : vector<1x1x64xf32> to vector<1x64xf32>
    %20 = arith.truncf %2 : vector<8x64xf32> to vector<8x64xbf16>
    %cst = arith.constant dense<0.000000e+00> : vector<8x64xf32>
    %21 = tpu.matmul %20, %9, %cst {dimension_numbers = #tpu.dot_dimension_numbers<[1], [0], [0], [1], [0, 0, 1, 1], [], []>} : vector<8x64xbf16>, vector<64x64xbf16>, vector<8x64xf32> -> vector<8x64xf32>
    %22 = arith.truncf %21 : vector<8x64xf32> to vector<8x64xbf16>
    %cst_18 = arith.constant dense<0.000000e+00> : vector<8x64xf32>
    %23 = tpu.matmul %4, %22, %cst_18 {dimension_numbers = #tpu.dot_dimension_numbers<[1], [0], [0], [1], [0, 0, 1, 1], [], []>} : vector<8x8xbf16>, vector<8x64xbf16>, vector<8x64xf32> -> vector<8x64xf32>
    %cst_19 = arith.constant 0.000000e+00 : f32
    %24 = vector.broadcast %cst_19 : f32 to vector<8x64xf32>
    %25 = arith.maximumf %23, %24 : vector<8x64xf32>
    %26 = vector.broadcast %13 : vector<1x64xf32> to vector<8x64xf32>
    %27 = arith.addf %25, %26 : vector<8x64xf32>
    %cst_20 = arith.constant dense<0.000000e+00> : vector<8xf32>
    %28 = vector.multi_reduction <add>, %27, %cst_20 [1] : vector<8x64xf32> to vector<8xf32>
    %29 = vector.shape_cast %28 : vector<8xf32> to vector<8x1xf32>
    %cst_21 = arith.constant 6.400000e+01 : f32
    %30 = vector.broadcast %cst_21 : f32 to vector<8x1xf32>
    %31 = arith.divf %29, %30 : vector<8x1xf32>
    %32 = vector.broadcast %31 : vector<8x1xf32> to vector<8x64xf32>
    %33 = arith.subf %27, %32 : vector<8x64xf32>
    %34 = arith.mulf %33, %33 : vector<8x64xf32>
    %cst_22 = arith.constant dense<0.000000e+00> : vector<8xf32>
    %35 = vector.multi_reduction <add>, %34, %cst_22 [1] : vector<8x64xf32> to vector<8xf32>
    %36 = vector.shape_cast %35 : vector<8xf32> to vector<8x1xf32>
    %cst_23 = arith.constant 6.400000e+01 : f32
    %37 = vector.broadcast %cst_23 : f32 to vector<8x1xf32>
    %38 = arith.divf %36, %37 : vector<8x1xf32>
    %39 = vector.broadcast %31 : vector<8x1xf32> to vector<8x64xf32>
    %40 = arith.subf %27, %39 : vector<8x64xf32>
    %cst_24 = arith.constant 9.99999974E-6 : f32
    %41 = vector.broadcast %cst_24 : f32 to vector<8x1xf32>
    %42 = arith.addf %38, %41 : vector<8x1xf32>
    %43 = math.rsqrt %42 : vector<8x1xf32>
    %44 = vector.broadcast %43 : vector<8x1xf32> to vector<8x64xf32>
    %45 = arith.mulf %40, %44 : vector<8x64xf32>
    %46 = vector.broadcast %15 : vector<1x64xf32> to vector<8x64xf32>
    %47 = arith.mulf %45, %46 : vector<8x64xf32>
    %48 = vector.broadcast %17 : vector<1x64xf32> to vector<8x64xf32>
    %49 = arith.addf %47, %48 : vector<8x64xf32>
    %50 = arith.addf %49, %2 : vector<8x64xf32>
    %51 = arith.truncf %50 : vector<8x64xf32> to vector<8x64xbf16>
    %cst_25 = arith.constant dense<0.000000e+00> : vector<8x64xf32>
    %52 = tpu.matmul %51, %9, %cst_25 {dimension_numbers = #tpu.dot_dimension_numbers<[1], [0], [0], [1], [0, 0, 1, 1], [], []>} : vector<8x64xbf16>, vector<64x64xbf16>, vector<8x64xf32> -> vector<8x64xf32>
    %53 = arith.truncf %52 : vector<8x64xf32> to vector<8x64xbf16>
    %cst_26 = arith.constant dense<0.000000e+00> : vector<8x64xf32>
    %54 = tpu.matmul %4, %53, %cst_26 {dimension_numbers = #tpu.dot_dimension_numbers<[1], [0], [0], [1], [0, 0, 1, 1], [], []>} : vector<8x8xbf16>, vector<8x64xbf16>, vector<8x64xf32> -> vector<8x64xf32>
    %cst_27 = arith.constant 0.000000e+00 : f32
    %55 = vector.broadcast %cst_27 : f32 to vector<8x64xf32>
    %56 = arith.maximumf %54, %55 : vector<8x64xf32>
    %57 = vector.broadcast %13 : vector<1x64xf32> to vector<8x64xf32>
    %58 = arith.addf %56, %57 : vector<8x64xf32>
    %cst_28 = arith.constant dense<0.000000e+00> : vector<8xf32>
    %59 = vector.multi_reduction <add>, %58, %cst_28 [1] : vector<8x64xf32> to vector<8xf32>
    %60 = vector.shape_cast %59 : vector<8xf32> to vector<8x1xf32>
    %cst_29 = arith.constant 6.400000e+01 : f32
    %61 = vector.broadcast %cst_29 : f32 to vector<8x1xf32>
    %62 = arith.divf %60, %61 : vector<8x1xf32>
    %63 = vector.broadcast %62 : vector<8x1xf32> to vector<8x64xf32>
    %64 = arith.subf %58, %63 : vector<8x64xf32>
    %65 = arith.mulf %64, %64 : vector<8x64xf32>
    %cst_30 = arith.constant dense<0.000000e+00> : vector<8xf32>
    %66 = vector.multi_reduction <add>, %65, %cst_30 [1] : vector<8x64xf32> to vector<8xf32>
    %67 = vector.shape_cast %66 : vector<8xf32> to vector<8x1xf32>
    %cst_31 = arith.constant 6.400000e+01 : f32
    %68 = vector.broadcast %cst_31 : f32 to vector<8x1xf32>
    %69 = arith.divf %67, %68 : vector<8x1xf32>
    %70 = vector.broadcast %62 : vector<8x1xf32> to vector<8x64xf32>
    %71 = arith.subf %58, %70 : vector<8x64xf32>
    %cst_32 = arith.constant 9.99999974E-6 : f32
    %72 = vector.broadcast %cst_32 : f32 to vector<8x1xf32>
    %73 = arith.addf %69, %72 : vector<8x1xf32>
    %74 = math.rsqrt %73 : vector<8x1xf32>
    %75 = vector.broadcast %74 : vector<8x1xf32> to vector<8x64xf32>
    %76 = arith.mulf %71, %75 : vector<8x64xf32>
    %77 = vector.broadcast %15 : vector<1x64xf32> to vector<8x64xf32>
    %78 = arith.mulf %76, %77 : vector<8x64xf32>
    %79 = vector.broadcast %17 : vector<1x64xf32> to vector<8x64xf32>
    %80 = arith.addf %78, %79 : vector<8x64xf32>
    %81 = arith.addf %80, %50 : vector<8x64xf32>
    %82 = arith.truncf %81 : vector<8x64xf32> to vector<8x64xbf16>
    %cst_33 = arith.constant dense<0.000000e+00> : vector<8x64xf32>
    %83 = tpu.matmul %82, %9, %cst_33 {dimension_numbers = #tpu.dot_dimension_numbers<[1], [0], [0], [1], [0, 0, 1, 1], [], []>} : vector<8x64xbf16>, vector<64x64xbf16>, vector<8x64xf32> -> vector<8x64xf32>
    %84 = arith.truncf %83 : vector<8x64xf32> to vector<8x64xbf16>
    %cst_34 = arith.constant dense<0.000000e+00> : vector<8x64xf32>
    %85 = tpu.matmul %4, %84, %cst_34 {dimension_numbers = #tpu.dot_dimension_numbers<[1], [0], [0], [1], [0, 0, 1, 1], [], []>} : vector<8x8xbf16>, vector<8x64xbf16>, vector<8x64xf32> -> vector<8x64xf32>
    %cst_35 = arith.constant 0.000000e+00 : f32
    %86 = vector.broadcast %cst_35 : f32 to vector<8x64xf32>
    %87 = arith.maximumf %85, %86 : vector<8x64xf32>
    %88 = vector.broadcast %13 : vector<1x64xf32> to vector<8x64xf32>
    %89 = arith.addf %87, %88 : vector<8x64xf32>
    %cst_36 = arith.constant dense<0.000000e+00> : vector<8xf32>
    %90 = vector.multi_reduction <add>, %89, %cst_36 [1] : vector<8x64xf32> to vector<8xf32>
    %91 = vector.shape_cast %90 : vector<8xf32> to vector<8x1xf32>
    %cst_37 = arith.constant 6.400000e+01 : f32
    %92 = vector.broadcast %cst_37 : f32 to vector<8x1xf32>
    %93 = arith.divf %91, %92 : vector<8x1xf32>
    %94 = vector.broadcast %93 : vector<8x1xf32> to vector<8x64xf32>
    %95 = arith.subf %89, %94 : vector<8x64xf32>
    %96 = arith.mulf %95, %95 : vector<8x64xf32>
    %cst_38 = arith.constant dense<0.000000e+00> : vector<8xf32>
    %97 = vector.multi_reduction <add>, %96, %cst_38 [1] : vector<8x64xf32> to vector<8xf32>
    %98 = vector.shape_cast %97 : vector<8xf32> to vector<8x1xf32>
    %cst_39 = arith.constant 6.400000e+01 : f32
    %99 = vector.broadcast %cst_39 : f32 to vector<8x1xf32>
    %100 = arith.divf %98, %99 : vector<8x1xf32>
    %101 = vector.broadcast %93 : vector<8x1xf32> to vector<8x64xf32>
    %102 = arith.subf %89, %101 : vector<8x64xf32>
    %cst_40 = arith.constant 9.99999974E-6 : f32
    %103 = vector.broadcast %cst_40 : f32 to vector<8x1xf32>
    %104 = arith.addf %100, %103 : vector<8x1xf32>
    %105 = math.rsqrt %104 : vector<8x1xf32>
    %106 = vector.broadcast %105 : vector<8x1xf32> to vector<8x64xf32>
    %107 = arith.mulf %102, %106 : vector<8x64xf32>
    %108 = vector.broadcast %15 : vector<1x64xf32> to vector<8x64xf32>
    %109 = arith.mulf %107, %108 : vector<8x64xf32>
    %110 = vector.broadcast %17 : vector<1x64xf32> to vector<8x64xf32>
    %111 = arith.addf %109, %110 : vector<8x64xf32>
    %112 = arith.addf %111, %81 : vector<8x64xf32>
    %113 = arith.truncf %112 : vector<8x64xf32> to vector<8x64xbf16>
    %cst_41 = arith.constant dense<0.000000e+00> : vector<8x64xf32>
    %114 = tpu.matmul %113, %10, %cst_41 {dimension_numbers = #tpu.dot_dimension_numbers<[1], [0], [0], [1], [0, 0, 1, 1], [], []>} : vector<8x64xbf16>, vector<64x64xbf16>, vector<8x64xf32> -> vector<8x64xf32>
    %115 = arith.truncf %114 : vector<8x64xf32> to vector<8x64xbf16>
    %cst_42 = arith.constant dense<0.000000e+00> : vector<8x8xf32>
    %116 = tpu.matmul %115, %113, %cst_42 {dimension_numbers = #tpu.dot_dimension_numbers<[1], [1], [0], [0], [0, 0, 1, 0], [], []>} : vector<8x64xbf16>, vector<8x64xbf16>, vector<8x8xf32> -> vector<8x8xf32>
    %117 = vector.broadcast %6 : vector<1x8xf32> to vector<8x8xf32>
    %118 = arith.addf %116, %117 : vector<8x8xf32>
    %cst_43 = arith.constant dense<0xFF800000> : vector<8xf32>
    %119 = vector.multi_reduction <maximumf>, %118, %cst_43 [1] : vector<8x8xf32> to vector<8xf32>
    %120 = vector.shape_cast %119 : vector<8xf32> to vector<8x1xf32>
    %121 = vector.broadcast %120 : vector<8x1xf32> to vector<8x8xf32>
    %122 = arith.subf %118, %121 : vector<8x8xf32>
    %123 = math.exp %122 : vector<8x8xf32>
    %cst_44 = arith.constant dense<0.000000e+00> : vector<8xf32>
    %124 = vector.multi_reduction <add>, %123, %cst_44 [1] : vector<8x8xf32> to vector<8xf32>
    %125 = vector.shape_cast %124 : vector<8xf32> to vector<8x1xf32>
    %126 = vector.broadcast %125 : vector<8x1xf32> to vector<8x8xf32>
    %127 = arith.divf %123, %126 : vector<8x8xf32>
    %128 = arith.truncf %127 : vector<8x8xf32> to vector<8x8xbf16>
    %cst_45 = arith.constant dense<0.000000e+00> : vector<8x64xf32>
    %129 = tpu.matmul %128, %113, %cst_45 {dimension_numbers = #tpu.dot_dimension_numbers<[1], [0], [0], [1], [0, 0, 1, 1], [], []>} : vector<8x8xbf16>, vector<8x64xbf16>, vector<8x64xf32> -> vector<8x64xf32>
    %130 = vector.broadcast %8 : vector<8x1xf32> to vector<8x64xf32>
    %131 = arith.mulf %129, %130 : vector<8x64xf32>
    %132 = vector.broadcast %19 : vector<1x64xf32> to vector<8x64xf32>
    %133 = arith.addf %131, %132 : vector<8x64xf32>
    %134 = tpu.concatenate %133, %112 in 1 : vector<8x64xf32>, vector<8x64xf32> -> vector<8x128xf32>
    %c0_46 = arith.constant 0 : index
    %c0_47 = arith.constant 0 : index
    %c0_48 = arith.constant 0 : index
    %135 = vector.load %arg8[%c0_46, %c0_47, %c0_48] : memref<1x8x128xf32, #tpu.memory_space<vmem>>, vector<1x8x128xf32>
    %136 = vector.shape_cast %135 : vector<1x8x128xf32> to vector<8x128xf32>
    %137 = vector.shape_cast %134 : vector<8x128xf32> to vector<1x8x128xf32>
    tpu.vector_store %arg8[%c0_46, %c0_47, %c0_48], %137 {strides = array<i32>} : memref<1x8x128xf32, #tpu.memory_space<vmem>>, vector<1x8x128xf32>,
    return
  }
  func.func @transform_0(%arg0: i32) -> (i32, i32, i32) {
    %c0_i32 = arith.constant 0 : i32
    %c0_i32_0 = arith.constant 0 : i32
    %c0_i32_1 = arith.constant 0 : i32
    return %arg0, %c0_i32, %c0_i32_0 : i32, i32, i32
  }
  func.func @transform_1(%arg0: i32) -> (i32, i32, i32) {
    %c0_i32 = arith.constant 0 : i32
    %c0_i32_0 = arith.constant 0 : i32
    %c0_i32_1 = arith.constant 0 : i32
    return %arg0, %c0_i32, %c0_i32_0 : i32, i32, i32
  }
  func.func @transform_2(%arg0: i32) -> (i32, i32, i32) {
    %c0_i32 = arith.constant 0 : i32
    %c0_i32_0 = arith.constant 0 : i32
    %c0_i32_1 = arith.constant 0 : i32
    return %arg0, %c0_i32, %c0_i32_0 : i32, i32, i32
  }
  func.func @transform_3(%arg0: i32) -> (i32, i32, i32) {
    %c0_i32 = arith.constant 0 : i32
    %c0_i32_0 = arith.constant 0 : i32
    %c0_i32_1 = arith.constant 0 : i32
    return %arg0, %c0_i32, %c0_i32_0 : i32, i32, i32
  }
  func.func @transform_4(%arg0: i32) -> (i32, i32) {
    %c0_i32 = arith.constant 0 : i32
    %c0_i32_0 = arith.constant 0 : i32
    %c0_i32_1 = arith.constant 0 : i32
    return %c0_i32, %c0_i32_0 : i32, i32
  }
  func.func @transform_5(%arg0: i32) -> (i32, i32) {
    %c0_i32 = arith.constant 0 : i32
    %c0_i32_0 = arith.constant 0 : i32
    %c0_i32_1 = arith.constant 0 : i32
    return %c0_i32, %c0_i32_0 : i32, i32
  }
  func.func @transform_6(%arg0: i32) -> (i32, i32, i32) {
    %c0_i32 = arith.constant 0 : i32
    %c0_i32_0 = arith.constant 0 : i32
    %c0_i32_1 = arith.constant 0 : i32
    %c0_i32_2 = arith.constant 0 : i32
    return %c0_i32, %c0_i32_0, %c0_i32_1 : i32, i32, i32
  }
  func.func @transform_7(%arg0: i32) -> (i32, i32, i32) {
    %c0_i32 = arith.constant 0 : i32
    %c0_i32_0 = arith.constant 0 : i32
    %c0_i32_1 = arith.constant 0 : i32
    return %arg0, %c0_i32, %c0_i32_0 : i32, i32, i32
  }
}

</mosaic_0001>

<llo_original>
// kernel: tpu_custom_call.1
$region0: #{tpu_custom_call.1}
  #allocation0 [shape = 'u32[]', space=smem, size = 0x4, offset = 0x4, fixed_abs, tag = 'smem constant byte address 0x4 - core index']
  #allocation1 [shape = 'u32[144,128]{1,0:T(1,128)}', space=vmem, size = 0x12000, scoped, tag = 'internal scratch']
  %s0 = inlined_call_operand.hbm [shape: bf16[2,8,64], index: 0, kind: input, shape index: {}]
  %s1 = inlined_call_operand.hbm [shape: bf16[2,8,8], index: 1, kind: input, shape index: {}]
  %s2 = inlined_call_operand.hbm [shape: f32[2,1,8], index: 2, kind: input, shape index: {}]
  %s3 = inlined_call_operand.vmem [shape: f32[2,8,1], index: 3, kind: input, shape index: {}]
  %s4 = inlined_call_operand.vmem [shape: bf16[64,64], index: 4, kind: input, shape index: {}]
  %s5 = inlined_call_operand.hbm [shape: bf16[64,64], index: 5, kind: input, shape index: {}]
  %s6 = inlined_call_operand.vmem [shape: f32[4,1,64], index: 6, kind: input, shape index: {}]
  %s7 = inlined_call_operand.hbm [shape: f32[2,8,128], index: 7, kind: output, shape index: {}]
  %s8 = sld [smem:[#allocation0]]
  $region77: #{tpu_custom_call.1} parent=0
    _
  %s10 = ssub.s32 1, %s8
  %s11 = scalar_select 0, %s10, %s8
  $region1: #{tpu_custom_call.1} parent=0
    #allocation2 [shape = 'u8[4096]{0}', space=vmem, size = 0x1000, scoped, tag = 'input window, operand 0']
    #allocation3 [shape = 's32[2]{0}', space=sflag, size = 0x8, scoped, tag = 'scoped memory for tpu_custom_call.1']
    #allocation4 [shape = 's32[2]{0}', space=sflag, size = 0x8, scoped, tag = 'scoped memory for tpu_custom_call.1']
    #allocation5 [shape = 'u8[4096]{0}', space=vmem, size = 0x1000, scoped, tag = 'input window, operand 1']
    #allocation6 [shape = 's32[2]{0}', space=sflag, size = 0x8, scoped, tag = 'scoped memory for tpu_custom_call.1']
    #allocation7 [shape = 'u8[1024]{0}', space=vmem, size = 0x400, scoped, tag = 'input window, operand 2']
    #allocation8 [shape = 'u8[16384]{0}', space=vmem, size = 0x4000, scoped, tag = 'input window, operand 5, single buffered']
    #allocation9 [shape = 's32[1]{0}', space=sflag, size = 0x4, scoped, tag = 'scoped memory for tpu_custom_call.1']
    #allocation10 [shape = 'u8[8192]{0}', space=vmem, size = 0x2000, scoped, tag = 'output window, operand 0']
    %12 = vsyncpa [#allocation3], 0
    %s13 = scalar_lea.sflag [#allocation3], 1
    %14 = vsyncpa %s13, 0
    %15 = vsyncpa [#allocation6], 0
    %s16 = scalar_lea.sflag [#allocation6], 1
    %17 = vsyncpa %s16, 0
    %18 = vsyncpa [#allocation9], 0
    %19 = vsyncpa [#allocation4], 0
    %s20 = scalar_lea.sflag [#allocation4], 1
    %21 = vsyncpa %s20, 0
    loop: start=0, step=1, limit=4
    $region2: #{tpu_custom_call.1} parent=1 // loop_pre_header
      _
    $region3: #{tpu_custom_call.1} parent=1 // loop_header
      %s23 = sphi 0, %s27
      %p24 = scmp.ge.s32.totalorder %s23, 4
      %s33 = sphi 0, %s35
      %s36 = sphi 0, %s33
      %s37 = sphi 0, %s36
      %s53 = sphi 0, %s37
      %s59 = sphi 0, %s61
      %s62 = sphi 0, %s59
      %s63 = sphi 0, %s62
      %s79 = sphi 0, %s63
      %s85 = sphi 0, %s87
      %s88 = sphi 0, %s85
      %s89 = sphi 0, %s88
      %s105 = sphi 0, %s89
      %s111 = sphi 0, %s113
      %s114 = sphi 0, %s111
      %s115 = sphi 0, %s114
      %s131 = sphi 0, %s115
      %s135 = sphi 0, %s135
      %s137 = sphi 0, %s135
      %s138 = sphi 0, %s137
      %s152 = sphi 0, %s138
      %s156 = sphi 0, %s156
      %s158 = sphi 0, %s156
      %s159 = sphi 0, %s158
      %s173 = sphi 0, %s159
      %s177 = sphi 0, %s177
      %s179 = sphi 0, %s177
      %s180 = sphi 0, %s179
      %s194 = sphi 0, %s180
      %s200 = sphi 0, %s202
      %s203 = sphi 0, %s200
      %s204 = sphi 0, %s203
      %s220 = sphi 0, %s204
    $region4: #{tpu_custom_call.1} parent=1 // loop_header_branch
      %26 = sbr.rel (%p24) target = $region8
    $region5: #{tpu_custom_call.1} parent=1 // loop_body
      %s28 = ssub.s32 %s23, 1
      %s29 = ssub.s32 %s23, 2
      %s30 = sadd.s32 %s23, 1
      %s31 = ssub.s32 %s23, %s30
      %p32 = scmp.eq.s32.totalorder %s31, 0
      %s34 = sadd.s32 %s33, 1
      %s35 = scalar_select %p32, %s33, %s34
      %p38 = pneg %p32
      %p39 = scmp.eq.s32.totalorder %s23, 1
      %p40 = por %p38, %p39
      %p41 = scmp.ne.s32.totalorder %s33, %s36
      %p42 = scmp.eq.s32.totalorder %s23, 0
      %p43 = por %p41, %p42
      %p44 = scmp.ne.s32.totalorder %s33, %s36
      %p45 = scmp.eq.s32.totalorder %s28, 1
      %p46 = por %p44, %p45
      %p47 = scmp.ne.s32.totalorder %s36, %s37
      %p48 = scmp.eq.s32.totalorder %s28, 0
      %p49 = por %p47, %p48
      %p50 = scmp.ne.s32.totalorder %s36, %s37
      %p51 = scmp.eq.s32.totalorder %s29, 1
      %p52 = por %p50, %p51
      %p54 = scmp.ne.s32.totalorder %s37, %s53
      %p55 = scmp.eq.s32.totalorder %s29, 0
      %p56 = por %p54, %p55
      %s57 = ssub.s32 %s23, %s30
      %p58 = scmp.eq.s32.totalorder %s57, 0
      %s60 = sadd.s32 %s59, 1
      %s61 = scalar_select %p58, %s59, %s60
      %p64 = pneg %p58
      %p65 = scmp.eq.s32.totalorder %s23, 1
      %p66 = por %p64, %p65
      %p67 = scmp.ne.s32.totalorder %s59, %s62
      %p68 = scmp.eq.s32.totalorder %s23, 0
      %p69 = por %p67, %p68
      %p70 = scmp.ne.s32.totalorder %s59, %s62
      %p71 = scmp.eq.s32.totalorder %s28, 1
      %p72 = por %p70, %p71
      %p73 = scmp.ne.s32.totalorder %s62, %s63
      %p74 = scmp.eq.s32.totalorder %s28, 0
      %p75 = por %p73, %p74
      %p76 = scmp.ne.s32.totalorder %s62, %s63
      %p77 = scmp.eq.s32.totalorder %s29, 1
      %p78 = por %p76, %p77
      %p80 = scmp.ne.s32.totalorder %s63, %s79
      %p81 = scmp.eq.s32.totalorder %s29, 0
      %p82 = por %p80, %p81
      %s83 = ssub.s32 %s23, %s30
      %p84 = scmp.eq.s32.totalorder %s83, 0
      %s86 = sadd.s32 %s85, 1
      %s87 = scalar_select %p84, %s85, %s86
      %p90 = pneg %p84
      %p91 = scmp.eq.s32.totalorder %s23, 1
      %p92 = por %p90, %p91
      %p93 = scmp.ne.s32.totalorder %s85, %s88
      %p94 = scmp.eq.s32.totalorder %s23, 0
      %p95 = por %p93, %p94
      %p96 = scmp.ne.s32.totalorder %s85, %s88
      %p97 = scmp.eq.s32.totalorder %s28, 1
      %p98 = por %p96, %p97
      %p99 = scmp.ne.s32.totalorder %s88, %s89
      %p100 = scmp.eq.s32.totalorder %s28, 0
      %p101 = por %p99, %p100
      %p102 = scmp.ne.s32.totalorder %s88, %s89
      %p103 = scmp.eq.s32.totalorder %s29, 1
      %p104 = por %p102, %p103
      %p106 = scmp.ne.s32.totalorder %s89, %s105
      %p107 = scmp.eq.s32.totalorder %s29, 0
      %p108 = por %p106, %p107
      %s109 = ssub.s32 %s23, %s30
      %p110 = scmp.eq.s32.totalorder %s109, 0
      %s112 = sadd.s32 %s111, 1
      %s113 = scalar_select %p110, %s111, %s112
      %p116 = pneg %p110
      %p117 = scmp.eq.s32.totalorder %s23, 1
      %p118 = por %p116, %p117
      %p119 = scmp.ne.s32.totalorder %s111, %s114
      %p120 = scmp.eq.s32.totalorder %s23, 0
      %p121 = por %p119, %p120
      %p122 = scmp.ne.s32.totalorder %s111, %s114
      %p123 = scmp.eq.s32.totalorder %s28, 1
      %p124 = por %p122, %p123
      %p125 = scmp.ne.s32.totalorder %s114, %s115
      %p126 = scmp.eq.s32.totalorder %s28, 0
      %p127 = por %p125, %p126
      %p128 = scmp.ne.s32.totalorder %s114, %s115
      %p129 = scmp.eq.s32.totalorder %s29, 1
      %p130 = por %p128, %p129
      %p132 = scmp.ne.s32.totalorder %s115, %s131
      %p133 = scmp.eq.s32.totalorder %s29, 0
      %p134 = por %p132, %p133
      %s136 = sadd.s32 %s135, 1
      %p139 = scmp.eq.s32.totalorder %s23, 1
      %p140 = scmp.ne.s32.totalorder %s135, %s137
      %p141 = scmp.eq.s32.totalorder %s23, 0
      %p142 = por %p140, %p141
      %p143 = scmp.ne.s32.totalorder %s135, %s137
      %p144 = scmp.eq.s32.totalorder %s28, 1
      %p145 = por %p143, %p144
      %p146 = scmp.ne.s32.totalorder %s137, %s138
      %p147 = scmp.eq.s32.totalorder %s28, 0
      %p148 = por %p146, %p147
      %p149 = scmp.ne.s32.totalorder %s137, %s138
      %p150 = scmp.eq.s32.totalorder %s29, 1
      %p151 = por %p149, %p150
      %p153 = scmp.ne.s32.totalorder %s138, %s152
      %p154 = scmp.eq.s32.totalorder %s29, 0
      %p155 = por %p153, %p154
      %s157 = sadd.s32 %s156, 1
      %p160 = scmp.eq.s32.totalorder %s23, 1
      %p161 = scmp.ne.s32.totalorder %s156, %s158
      %p162 = scmp.eq.s32.totalorder %s23, 0
      %p163 = por %p161, %p162
      %p164 = scmp.ne.s32.totalorder %s156, %s158
      %p165 = scmp.eq.s32.totalorder %s28, 1
      %p166 = por %p164, %p165
      %p167 = scmp.ne.s32.totalorder %s158, %s159
      %p168 = scmp.eq.s32.totalorder %s28, 0
      %p169 = por %p167, %p168
      %p170 = scmp.ne.s32.totalorder %s158, %s159
      %p171 = scmp.eq.s32.totalorder %s29, 1
      %p172 = por %p170, %p171
      %p174 = scmp.ne.s32.totalorder %s159, %s173
      %p175 = scmp.eq.s32.totalorder %s29, 0
      %p176 = por %p174, %p175
      %s178 = sadd.s32 %s177, 1
      %p181 = scmp.eq.s32.totalorder %s23, 1
      %p182 = scmp.ne.s32.totalorder %s177, %s179
      %p183 = scmp.eq.s32.totalorder %s23, 0
      %p184 = por %p182, %p183
      %p185 = scmp.ne.s32.totalorder %s177, %s179
      %p186 = scmp.eq.s32.totalorder %s28, 1
      %p187 = por %p185, %p186
      %p188 = scmp.ne.s32.totalorder %s179, %s180
      %p189 = scmp.eq.s32.totalorder %s28, 0
      %p190 = por %p188, %p189
      %p191 = scmp.ne.s32.totalorder %s179, %s180
      %p192 = scmp.eq.s32.totalorder %s29, 1
      %p193 = por %p191, %p192
      %p195 = scmp.ne.s32.totalorder %s180, %s194
      %p196 = scmp.eq.s32.totalorder %s29, 0
      %p197 = por %p195, %p196
      %s198 = ssub.s32 %s23, %s30
      %p199 = scmp.eq.s32.totalorder %s198, 0
      %s201 = sadd.s32 %s200, 1
      %s202 = scalar_select %p199, %s200, %s201
      %p205 = pneg %p199
      %p206 = scmp.eq.s32.totalorder %s23, 1
      %p207 = por %p205, %p206
      %p208 = scmp.ne.s32.totalorder %s200, %s203
      %p209 = scmp.eq.s32.totalorder %s23, 0
      %p210 = por %p208, %p209
      %p211 = scmp.ne.s32.totalorder %s200, %s203
      %p212 = scmp.eq.s32.totalorder %s28, 1
      %p213 = por %p211, %p212
      %p214 = scmp.ne.s32.totalorder %s203, %s204
      %p215 = scmp.eq.s32.totalorder %s28, 0
      %p216 = por %p214, %p215
      %p217 = scmp.ne.s32.totalorder %s203, %s204
      %p218 = scmp.eq.s32.totalorder %s29, 1
      %p219 = por %p217, %p218
      %p221 = scmp.ne.s32.totalorder %s204, %s220
      %p222 = scmp.eq.s32.totalorder %s29, 0
      %p223 = por %p221, %p222
      %p224 = scmp.le.s32.totalorder 1, %s23
      %p225 = scmp.lt.s32.totalorder %s23, 3
      %p226 = pnand %p224, %p225
      %p227 = pneg %p226
      // Predicated region
      $region9: #{tpu_custom_call.1} parent=5 // pred_check
        _
      $region10: #{tpu_custom_call.1} parent=5 // pred_check_branch
        %229 = sbr.rel (%p226) target = $region12
      $region11: #{tpu_custom_call.1} parent=5 // pred_region
        %s230 = ssub.s32 %s23, 1
        // Predicated region
        $region13: #{tpu_custom_call.1} parent=11 // pred_check
          %p231 = pneg %p148
        $region14: #{tpu_custom_call.1} parent=11 // pred_check_branch
          %233 = sbr.rel (%p231) target = $region16
        $region15: #{tpu_custom_call.1} parent=11 // pred_region
          _
        $region16: #{tpu_custom_call.1} parent=11 // pred_fallthru
          _
        // Predicated region
        $region17: #{tpu_custom_call.1} parent=11 // pred_check
          %p234 = pneg %p169
        $region18: #{tpu_custom_call.1} parent=11 // pred_check_branch
          %236 = sbr.rel (%p234) target = $region20
        $region19: #{tpu_custom_call.1} parent=11 // pred_region
          %s238 = ssub.s32 512, 512
          %239 = vsyncadd [#allocation9], %s238
          %s240 = sshll.u32 [#allocation8], 4
          %s241 = int_to_ptr.vmem [resolvable:$true] %s240
          %246 = dma.hbm_to_vmem [thread:$0]  %s5, 512, %s241, [#allocation9], 64, 64, 4
        $region20: #{tpu_custom_call.1} parent=11 // pred_fallthru
          _
        // Predicated region
        $region21: #{tpu_custom_call.1} parent=11 // pred_check
          %p247 = pneg %p190
        $region22: #{tpu_custom_call.1} parent=11 // pred_check_branch
          %249 = sbr.rel (%p247) target = $region24
        $region23: #{tpu_custom_call.1} parent=11 // pred_region
          _
        $region24: #{tpu_custom_call.1} parent=11 // pred_fallthru
          _
      $region12: #{tpu_custom_call.1} parent=5 // pred_fallthru
        _
      %p250 = scmp.lt.s32.totalorder %s23, 2
      // Predicated region
      $region25: #{tpu_custom_call.1} parent=5 // pred_check
        %p251 = pneg %p250
      $region26: #{tpu_custom_call.1} parent=5 // pred_check_branch
        %253 = sbr.rel (%p251) target = $region28
      $region27: #{tpu_custom_call.1} parent=5 // pred_region
        // Predicated region
        $region29: #{tpu_custom_call.1} parent=27 // pred_check
          %p254 = pneg %p43
        $region30: #{tpu_custom_call.1} parent=27 // pred_check_branch
          %256 = sbr.rel (%p254) target = $region32
        $region31: #{tpu_custom_call.1} parent=27 // pred_region
          %s257 = sand.u32 %s33, 1
          %s258 = scalar_lea.sflag [#allocation3], %s257
          %s259 = sand.u32 %s33, 1
          %s260 = smul.addr %s259, 4
          %s261 = scalar_lea.vmem [#allocation2], %s260
          %s263 = ssub.s32 64, 64
          %264 = vsyncadd %s258, %s263
          %s265 = smul.addr %s23, 64
          %s266 = scalar_lea.hbm %s0, %s265
          %s268 = sshll.u32 %s261, 4
          %s269 = int_to_ptr.vmem [resolvable:$true] %s268
          %271 = dma.hbm_to_vmem [thread:$0]  %s266, 64, %s269, %s258
        $region32: #{tpu_custom_call.1} parent=27 // pred_fallthru
          _
        // Predicated region
        $region33: #{tpu_custom_call.1} parent=27 // pred_check
          %p272 = pneg %p69
        $region34: #{tpu_custom_call.1} parent=27 // pred_check_branch
          %274 = sbr.rel (%p272) target = $region36
        $region35: #{tpu_custom_call.1} parent=27 // pred_region
          %s275 = sand.u32 %s23, 1
          %s276 = scalar_lea.sflag [#allocation6], %s275
          %s277 = sand.u32 %s59, 1
          %s278 = smul.addr %s277, 4
          %s279 = scalar_lea.vmem [#allocation5], %s278
          %s281 = ssub.s32 64, 64
          %282 = vsyncadd %s276, %s281
          %s283 = smul.addr %s23, 64
          %s284 = scalar_lea.hbm %s1, %s283
          %s286 = sshll.u32 %s279, 4
          %s287 = int_to_ptr.vmem [resolvable:$true] %s286
          %289 = dma.hbm_to_vmem [thread:$0]  %s284, 64, %s287, %s276
        $region36: #{tpu_custom_call.1} parent=27 // pred_fallthru
          _
        // Predicated region
        $region37: #{tpu_custom_call.1} parent=27 // pred_check
          %p290 = pneg %p95
        $region38: #{tpu_custom_call.1} parent=27 // pred_check_branch
          %292 = sbr.rel (%p290) target = $region40
        $region39: #{tpu_custom_call.1} parent=27 // pred_region
          %s293 = sand.u32 %s23, 1
          %s294 = scalar_lea.sflag [#allocation6], %s293
          %s295 = sand.u32 %s85, 1
          %s296 = scalar_lea.vmem [#allocation7], %s295
          %s298 = ssub.s32 16, 16
          %299 = vsyncadd %s294, %s298
          %s300 = smul.addr %s23, 16
          %s301 = scalar_lea.hbm %s2, %s300
          %s303 = sshll.u32 %s296, 4
          %s304 = int_to_ptr.vmem [resolvable:$true] %s303
          %306 = dma.hbm_to_vmem [thread:$0]  %s301, 16, %s304, %s294
        $region40: #{tpu_custom_call.1} parent=27 // pred_fallthru
          _
        // Predicated region
        $region41: #{tpu_custom_call.1} parent=27 // pred_check
          %p307 = pneg %p121
        $region42: #{tpu_custom_call.1} parent=27 // pred_check_branch
          %309 = sbr.rel (%p307) target = $region44
        $region43: #{tpu_custom_call.1} parent=27 // pred_region
          %p310 = scmp.lt.s32.totalorder %s23, 1
          %s311 = scalar_select %p310, %s23, 1
          %s312 = smul.addr %s311, 8
          %s313 = scalar_lea.vmem %s3, %s312
        $region44: #{tpu_custom_call.1} parent=27 // pred_fallthru
          _
      $region28: #{tpu_custom_call.1} parent=5 // pred_fallthru
        _
      %p314 = scmp.le.s32.totalorder 1, %s23
      %p315 = scmp.lt.s32.totalorder %s23, 3
      %p316 = pnand %p314, %p315
      %p317 = pneg %p316
      // Predicated region
      $region45: #{tpu_custom_call.1} parent=5 // pred_check
        _
      $region46: #{tpu_custom_call.1} parent=5 // pred_check_branch
        %319 = sbr.rel (%p316) target = $region48
      $region47: #{tpu_custom_call.1} parent=5 // pred_region
        %s320 = ssub.s32 %s23, 1
        %s321 = sand.u32 %s36, 1
        %s322 = scalar_lea.sflag [#allocation3], %s321
        %s323 = sand.u32 %s36, 1
        %s324 = smul.addr %s323, 4
        %s325 = scalar_lea.vmem [#allocation2], %s324
        // Predicated region
        $region49: #{tpu_custom_call.1} parent=47 // pred_check
          %p326 = pneg %p49
        $region50: #{tpu_custom_call.1} parent=47 // pred_check_branch
          %328 = sbr.rel (%p326) target = $region52
        $region51: #{tpu_custom_call.1} parent=47 // pred_region
          %329 = dma.done %s322, 64
        $region52: #{tpu_custom_call.1} parent=47 // pred_fallthru
          _
        %s330 = sand.u32 %s28, 1
        %s331 = scalar_lea.sflag [#allocation6], %s330
        %s332 = sand.u32 %s62, 1
        %s333 = smul.addr %s332, 4
        %s334 = scalar_lea.vmem [#allocation5], %s333
        // Predicated region
        $region53: #{tpu_custom_call.1} parent=47 // pred_check
          %p335 = pneg %p75
        $region54: #{tpu_custom_call.1} parent=47 // pred_check_branch
          %337 = sbr.rel (%p335) target = $region56
        $region55: #{tpu_custom_call.1} parent=47 // pred_region
          %338 = dma.done %s331, 64
        $region56: #{tpu_custom_call.1} parent=47 // pred_fallthru
          _
        %s339 = sand.u32 %s28, 1
        %s340 = scalar_lea.sflag [#allocation6], %s339
        %s341 = sand.u32 %s88, 1
        %s342 = scalar_lea.vmem [#allocation7], %s341
        // Predicated region
        $region57: #{tpu_custom_call.1} parent=47 // pred_check
          %p343 = pneg %p101
        $region58: #{tpu_custom_call.1} parent=47 // pred_check_branch
          %345 = sbr.rel (%p343) target = $region60
        $region59: #{tpu_custom_call.1} parent=47 // pred_region
          %346 = dma.done %s340, 16
        $region60: #{tpu_custom_call.1} parent=47 // pred_fallthru
          _
        // Predicated region
        $region61: #{tpu_custom_call.1} parent=47 // pred_check
          %p347 = pneg %p169
        $region62: #{tpu_custom_call.1} parent=47 // pred_check_branch
          %349 = sbr.rel (%p347) target = $region64
        $region63: #{tpu_custom_call.1} parent=47 // pred_region
          %350 = dma.done [#allocation9], 512
        $region64: #{tpu_custom_call.1} parent=47 // pred_fallthru
          _
        %s351 = sand.u32 %s36, 1
        %s352 = scalar_lea.sflag [#allocation3], %s351
        %s353 = sand.u32 %s36, 1
        %s354 = smul.addr %s353, 4
        %s355 = scalar_lea.vmem [#allocation2], %s354
        %p356 = pneg %p49
        %p357 = pneg %p46
        %s358 = sand.u32 %s28, 1
        %s359 = scalar_lea.sflag [#allocation6], %s358
        %s360 = sand.u32 %s62, 1
        %s361 = smul.addr %s360, 4
        %s362 = scalar_lea.vmem [#allocation5], %s361
        %p363 = pneg %p75
        %p364 = pneg %p72
        %s365 = sand.u32 %s28, 1
        %s366 = scalar_lea.sflag [#allocation6], %s365
        %s367 = sand.u32 %s88, 1
        %s368 = scalar_lea.vmem [#allocation7], %s367
        %p369 = pneg %p101
        %p370 = pneg %p98
        %p371 = scmp.lt.s32.totalorder %s28, 1
        %s372 = scalar_select %p371, %s28, 1
        %s373 = smul.addr %s372, 8
        %s374 = scalar_lea.vmem %s3, %s373
        %p375 = pneg %p127
        %p376 = pneg %p124
        %p377 = pneg %p148
        %p378 = pneg %p145
        %p379 = pneg %p169
        %p380 = pneg %p166
        %p381 = pneg %p190
        %p382 = pneg %p187
        %p383 = pneg %p216
        %p384 = pneg %p213
        %s385 = sand.u32 %s203, 1
        %s386 = scalar_lea.sflag [#allocation4], %s385
        %s387 = sand.u32 %s203, 1
        %s388 = smul.addr %s387, 8
        %s389 = scalar_lea.vmem [#allocation10], %s388
        %p390 = scmp.lt.s32.totalorder %s28, 1
        %s391 = scalar_select %p390, %s28, 1
        %s392 = smul.addr %s391, 8
        %s393 = scalar_lea.vmem %s3, %s392
        %v395 = vld [vmem:[%s325] sm:$0xf]
        %v396 = vunpack.c.l.bf16 %v395
        %v397 = vld [vmem:[%s334] sm:$0xf]
        %v398 = vld [vmem:[%s342] sm:$0x1]
        %v399 = vld [vmem:[%s393] sm:$0xff]
        %v400 = vld [vmem:[%s4] sm:$0xf]
        %v401 = vld [vmem:[%s4 + $0x4] sm:$0xf]
        %v402 = vld [vmem:[%s4 + $0x8] sm:$0xf]
        %v403 = vld [vmem:[%s4 + $0xc] sm:$0xf]
        %v404 = vld [vmem:[%s4 + $0x10] sm:$0xf]
        %v405 = vld [vmem:[%s4 + $0x14] sm:$0xf]
        %v406 = vld [vmem:[%s4 + $0x18] sm:$0xf]
        %v407 = vld [vmem:[%s4 + $0x1c] sm:$0xf]
        %v408 = vld [vmem:[#allocation8] sm:$0xf]
        %v409 = vld [vmem:[#allocation8 + $0x4] sm:$0xf]
        %v410 = vld [vmem:[#allocation8 + $0x8] sm:$0xf]
        %v411 = vld [vmem:[#allocation8 + $0xc] sm:$0xf]
        %v412 = vld [vmem:[#allocation8 + $0x10] sm:$0xf]
        %v413 = vld [vmem:[#allocation8 + $0x14] sm:$0xf]
        %v414 = vld [vmem:[#allocation8 + $0x18] sm:$0xf]
        %v415 = vld [vmem:[#allocation8 + $0x1c] sm:$0xf]
        %v416 = vld [vmem:[%s6] sm:$0x1]
        %v417 = vld [vmem:[%s6 + $0x1] sm:$0x1]
        %v418 = vld [vmem:[%s6 + $0x2] sm:$0x1]
        %v419 = vld [vmem:[%s6 + $0x3] sm:$0x1]
        %v428 = vunpack.c.l.b16 %v400
        %v429 = vunpack.c.l.b16 %v401
        %v430 = vunpack.c.l.b16 %v402
        %v431 = vunpack.c.l.b16 %v403
        %v432 = vunpack.c.l.b16 %v404
        %v433 = vunpack.c.l.b16 %v405
        %v434 = vunpack.c.l.b16 %v406
        %v435 = vunpack.c.l.b16 %v407
        %v436 = vpack.c.b16 %v429, %v428
        %v437 = vpack.c.b16 %v431, %v430
        %v438 = vpack.c.b16 %v433, %v432
        %v439 = vpack.c.b16 %v435, %v434
        %vm444 = vcmask 523264
        %v446 = vsel %vm444, %v395, 0
        %448 = vmatprep.subr.bf16.mxu0 0
        %449 = vmatpush1.bf16.msra.mxu0 %v436
        %450 = vmatprep.subr.bf16.mxu0 0
        %451 = vmatpush1.bf16.msra.mxu0 %v437
        %452 = vmatprep.subr.bf16.mxu0 0
        %453 = vmatpush1.bf16.msra.mxu0 %v438
        %454 = vmatprep.subr.bf16.mxu0 0
        %455 = vmatpush1.bf16.msra.mxu0 %v439
        %456 = vmatprep.subr.bf16.mxu0 0
        %457 = vmatpush1.bf16.msra.mxu0 0
        %458 = vmatprep.subr.bf16.mxu0 0
        %459 = vmatpush1.bf16.msra.mxu0 0
        %460 = vmatprep.subr.bf16.mxu0 0
        %461 = vmatpush1.bf16.msra.mxu0 0
        %462 = vmatprep.subr.bf16.mxu0 0
        %463 = vmatpush1.bf16.msra.mxu0 0
        %464 = vmatprep.subr.bf16.mxu0 0
        %465 = vmatpush1.bf16.msra.mxu0 0
        %466 = vmatprep.subr.bf16.mxu0 0
        %467 = vmatpush1.bf16.msra.mxu0 0
        %468 = vmatprep.subr.bf16.mxu0 0
        %469 = vmatpush1.bf16.msra.mxu0 0
        %470 = vmatprep.subr.bf16.mxu0 0
        %471 = vmatpush1.bf16.msra.mxu0 0
        %472 = vmatprep.subr.bf16.mxu0 0
        %473 = vmatpush1.bf16.msra.mxu0 0
        %474 = vmatprep.subr.bf16.mxu0 0
        %475 = vmatpush1.bf16.msra.mxu0 0
        %476 = vmatprep.subr.bf16.mxu0 0
        %477 = vmatpush1.bf16.msra.mxu0 0
        %478 = vmatprep.subr.bf16.mxu0 0
        %479 = vmatpush1.bf16.msra.mxu0 0
        %480 = vmatprep.mubr.bf16.mxu0 0
        %481 = vmatmul.mubr.bf16.gmra.mrb[0].mxu0 %v446
        %v482 = vpop.f32.mrb[0].mxu0
        %v483 = vadd.f32 0.0, %v482
        %v484 = vpop.f32.mrb[0].mxu0
        %v485 = vpop.f32.mrb[0].mxu0
        %v486 = vpop.f32.mrb[0].mxu0
        %487 = vdwg.mxu0
        %v488 = vpack.c.bf16 %v483, %v483
        %vm489 = vcmask 64512
        %v491 = vsel %vm489, %v397, 0
        %vm493 = vcmask 1043456
        %v495 = vsel %vm493, %v488, 0
        %497 = vmatprep.subr.bf16.mxu0 0
        %498 = vmatpush1.bf16.msra.mxu0 %v495
        %499 = vmatprep.subr.bf16.mxu0 0
        %500 = vmatpush1.bf16.msra.mxu0 0
        %501 = vmatprep.subr.bf16.mxu0 0
        %502 = vmatpush1.bf16.msra.mxu0 0
        %503 = vmatprep.subr.bf16.mxu0 0
        %504 = vmatpush1.bf16.msra.mxu0 0
        %505 = vmatprep.subr.bf16.mxu0 0
        %506 = vmatpush1.bf16.msra.mxu0 0
        %507 = vmatprep.subr.bf16.mxu0 0
        %508 = vmatpush1.bf16.msra.mxu0 0
        %509 = vmatprep.subr.bf16.mxu0 0
        %510 = vmatpush1.bf16.msra.mxu0 0
        %511 = vmatprep.subr.bf16.mxu0 0
        %512 = vmatpush1.bf16.msra.mxu0 0
        %513 = vmatprep.subr.bf16.mxu0 0
        %514 = vmatpush1.bf16.msra.mxu0 0
        %515 = vmatprep.subr.bf16.mxu0 0
        %516 = vmatpush1.bf16.msra.mxu0 0
        %517 = vmatprep.subr.bf16.mxu0 0
        %518 = vmatpush1.bf16.msra.mxu0 0
        %519 = vmatprep.subr.bf16.mxu0 0
        %520 = vmatpush1.bf16.msra.mxu0 0
        %521 = vmatprep.subr.bf16.mxu0 0
        %522 = vmatpush1.bf16.msra.mxu0 0
        %523 = vmatprep.subr.bf16.mxu0 0
        %524 = vmatpush1.bf16.msra.mxu0 0
        %525 = vmatprep.subr.bf16.mxu0 0
        %526 = vmatpush1.bf16.msra.mxu0 0
        %527 = vmatprep.subr.bf16.mxu0 0
        %528 = vmatpush1.bf16.msra.mxu0 0
        %529 = vmatprep.mubr.bf16.mxu0 0
        %530 = vmatmul.mubr.bf16.gmra.mrb[0].mxu0 %v491
        %v531 = vpop.f32.mrb[0].mxu0
        %v532 = vadd.f32 0.0, %v531
        %v533 = vpop.f32.mrb[0].mxu0
        %v534 = vpop.f32.mrb[0].mxu0
        %v535 = vpop.f32.mrb[0].mxu0
        %536 = vdwg.mxu0
        %v537 = vmax.f32 %v532, 0.0
        %v539 = vlaneseq
        %v540 = vshrl.u32 %v539, 7
        %v541 = vsub.s32 0, %v540
        %v542 = vrot.slane %v416, %v541
        %v544 = vadd.f32 %v537, %v542
        %v545 = vsel %vm444, %v544, 0.0
        %546 = vadd.xlane.f32.xlu0 %v545
        %v547 = vpop.xlane.xlu0 %546
        %v548 = vrcp.pop 64.0
        %v549 = vmul.f32 %v547, %v548
        %v550 = vsub.f32 %v544, %v549
        %v551 = vmul.f32 %v550, %v550
        %v552 = vsel %vm444, %v551, 0.0
        %553 = vadd.xlane.f32.xlu0 %v552
        %v554 = vpop.xlane.xlu0 %553
        %v555 = vmul.f32 %v554, %v548
        %v556 = vadd.f32 %v555, 1e-05
        %v557 = vrsqrt.pop %v556
        %v558 = vmul.f32 %v550, %v557
        %v560 = vlaneseq
        %v561 = vshrl.u32 %v560, 7
        %v562 = vsub.s32 0, %v561
        %v563 = vrot.slane %v417, %v562
        %v565 = vmul.f32 %v558, %v563
        %v567 = vlaneseq
        %v568 = vshrl.u32 %v567, 7
        %v569 = vsub.s32 0, %v568
        %v570 = vrot.slane %v418, %v569
        %v572 = vadd.f32 %v565, %v570
        %v573 = vadd.f32 %v572, %v396
        %v574 = vpack.c.bf16 %v573, %v573
        %v576 = vsel %vm444, %v574, 0
        %578 = vmatprep.subr.bf16.mxu0 0
        %579 = vmatpush1.bf16.msra.mxu0 %v436
        %580 = vmatprep.subr.bf16.mxu0 0
        %581 = vmatpush1.bf16.msra.mxu0 %v437
        %582 = vmatprep.subr.bf16.mxu0 0
        %583 = vmatpush1.bf16.msra.mxu0 %v438
        %584 = vmatprep.subr.bf16.mxu0 0
        %585 = vmatpush1.bf16.msra.mxu0 %v439
        %586 = vmatprep.subr.bf16.mxu0 0
        %587 = vmatpush1.bf16.msra.mxu0 0
        %588 = vmatprep.subr.bf16.mxu0 0
        %589 = vmatpush1.bf16.msra.mxu0 0
        %590 = vmatprep.subr.bf16.mxu0 0
        %591 = vmatpush1.bf16.msra.mxu0 0
        %592 = vmatprep.subr.bf16.mxu0 0
        %593 = vmatpush1.bf16.msra.mxu0 0
        %594 = vmatprep.subr.bf16.mxu0 0
        %595 = vmatpush1.bf16.msra.mxu0 0
        %596 = vmatprep.subr.bf16.mxu0 0
        %597 = vmatpush1.bf16.msra.mxu0 0
        %598 = vmatprep.subr.bf16.mxu0 0
        %599 = vmatpush1.bf16.msra.mxu0 0
        %600 = vmatprep.subr.bf16.mxu0 0
        %601 = vmatpush1.bf16.msra.mxu0 0
        %602 = vmatprep.subr.bf16.mxu0 0
        %603 = vmatpush1.bf16.msra.mxu0 0
        %604 = vmatprep.subr.bf16.mxu0 0
        %605 = vmatpush1.bf16.msra.mxu0 0
        %606 = vmatprep.subr.bf16.mxu0 0
        %607 = vmatpush1.bf16.msra.mxu0 0
        %608 = vmatprep.subr.bf16.mxu0 0
        %609 = vmatpush1.bf16.msra.mxu0 0
        %610 = vmatprep.mubr.bf16.mxu0 0
        %611 = vmatmul.mubr.bf16.gmra.mrb[0].mxu0 %v576
        %v612 = vpop.f32.mrb[0].mxu0
        %v613 = vadd.f32 0.0, %v612
        %v614 = vpop.f32.mrb[0].mxu0
        %v615 = vpop.f32.mrb[0].mxu0
        %v616 = vpop.f32.mrb[0].mxu0
        %617 = vdwg.mxu0
        %v618 = vpack.c.bf16 %v613, %v613
        %v620 = vsel %vm493, %v618, 0
        %622 = vmatprep.subr.bf16.mxu0 0
        %623 = vmatpush1.bf16.msra.mxu0 %v620
        %624 = vmatprep.subr.bf16.mxu0 0
        %625 = vmatpush1.bf16.msra.mxu0 0
        %626 = vmatprep.subr.bf16.mxu0 0
        %627 = vmatpush1.bf16.msra.mxu0 0
        %628 = vmatprep.subr.bf16.mxu0 0
        %629 = vmatpush1.bf16.msra.mxu0 0
        %630 = vmatprep.subr.bf16.mxu0 0
        %631 = vmatpush1.bf16.msra.mxu0 0
        %632 = vmatprep.subr.bf16.mxu0 0
        %633 = vmatpush1.bf16.msra.mxu0 0
        %634 = vmatprep.subr.bf16.mxu0 0
        %635 = vmatpush1.bf16.msra.mxu0 0
        %636 = vmatprep.subr.bf16.mxu0 0
        %637 = vmatpush1.bf16.msra.mxu0 0
        %638 = vmatprep.subr.bf16.mxu0 0
        %639 = vmatpush1.bf16.msra.mxu0 0
        %640 = vmatprep.subr.bf16.mxu0 0
        %641 = vmatpush1.bf16.msra.mxu0 0
        %642 = vmatprep.subr.bf16.mxu0 0
        %643 = vmatpush1.bf16.msra.mxu0 0
        %644 = vmatprep.subr.bf16.mxu0 0
        %645 = vmatpush1.bf16.msra.mxu0 0
        %646 = vmatprep.subr.bf16.mxu0 0
        %647 = vmatpush1.bf16.msra.mxu0 0
        %648 = vmatprep.subr.bf16.mxu0 0
        %649 = vmatpush1.bf16.msra.mxu0 0
        %650 = vmatprep.subr.bf16.mxu0 0
        %651 = vmatpush1.bf16.msra.mxu0 0
        %652 = vmatprep.subr.bf16.mxu0 0
        %653 = vmatpush1.bf16.msra.mxu0 0
        %654 = vmatprep.mubr.bf16.mxu0 0
        %655 = vmatmul.mubr.bf16.gmra.mrb[0].mxu0 %v491
        %v656 = vpop.f32.mrb[0].mxu0
        %v657 = vadd.f32 0.0, %v656
        %v658 = vpop.f32.mrb[0].mxu0
        %v659 = vpop.f32.mrb[0].mxu0
        %v660 = vpop.f32.mrb[0].mxu0
        %661 = vdwg.mxu0
        %v662 = vmax.f32 %v657, 0.0
        %v663 = vadd.f32 %v662, %v542
        %v664 = vsel %vm444, %v663, 0.0
        %665 = vadd.xlane.f32.xlu0 %v664
        %v666 = vpop.xlane.xlu0 %665
        %v667 = vmul.f32 %v666, %v548
        %v668 = vsub.f32 %v663, %v667
        %v669 = vmul.f32 %v668, %v668
        %v670 = vsel %vm444, %v669, 0.0
        %671 = vadd.xlane.f32.xlu0 %v670
        %v672 = vpop.xlane.xlu0 %671
        %v673 = vmul.f32 %v672, %v548
        %v674 = vadd.f32 %v673, 1e-05
        %v675 = vrsqrt.pop %v674
        %v676 = vmul.f32 %v668, %v675
        %v677 = vmul.f32 %v676, %v563
        %v678 = vadd.f32 %v677, %v570
        %v679 = vadd.f32 %v678, %v573
        %v680 = vpack.c.bf16 %v679, %v679
        %v682 = vsel %vm444, %v680, 0
        %684 = vmatprep.subr.bf16.mxu0 0
        %685 = vmatpush1.bf16.msra.mxu0 %v436
        %686 = vmatprep.subr.bf16.mxu0 0
        %687 = vmatpush1.bf16.msra.mxu0 %v437
        %688 = vmatprep.subr.bf16.mxu0 0
        %689 = vmatpush1.bf16.msra.mxu0 %v438
        %690 = vmatprep.subr.bf16.mxu0 0
        %691 = vmatpush1.bf16.msra.mxu0 %v439
        %692 = vmatprep.subr.bf16.mxu0 0
        %693 = vmatpush1.bf16.msra.mxu0 0
        %694 = vmatprep.subr.bf16.mxu0 0
        %695 = vmatpush1.bf16.msra.mxu0 0
        %696 = vmatprep.subr.bf16.mxu0 0
        %697 = vmatpush1.bf16.msra.mxu0 0
        %698 = vmatprep.subr.bf16.mxu0 0
        %699 = vmatpush1.bf16.msra.mxu0 0
        %700 = vmatprep.subr.bf16.mxu0 0
        %701 = vmatpush1.bf16.msra.mxu0 0
        %702 = vmatprep.subr.bf16.mxu0 0
        %703 = vmatpush1.bf16.msra.mxu0 0
        %704 = vmatprep.subr.bf16.mxu0 0
        %705 = vmatpush1.bf16.msra.mxu0 0
        %706 = vmatprep.subr.bf16.mxu0 0
        %707 = vmatpush1.bf16.msra.mxu0 0
        %708 = vmatprep.subr.bf16.mxu0 0
        %709 = vmatpush1.bf16.msra.mxu0 0
        %710 = vmatprep.subr.bf16.mxu0 0
        %711 = vmatpush1.bf16.msra.mxu0 0
        %712 = vmatprep.subr.bf16.mxu0 0
        %713 = vmatpush1.bf16.msra.mxu0 0
        %714 = vmatprep.subr.bf16.mxu0 0
        %715 = vmatpush1.bf16.msra.mxu0 0
        %716 = vmatprep.mubr.bf16.mxu0 0
        %717 = vmatmul.mubr.bf16.gmra.mrb[0].mxu0 %v682
        %v718 = vpop.f32.mrb[0].mxu0
        %v719 = vadd.f32 0.0, %v718
        %v720 = vpop.f32.mrb[0].mxu0
        %v721 = vpop.f32.mrb[0].mxu0
        %v722 = vpop.f32.mrb[0].mxu0
        %723 = vdwg.mxu0
        %v724 = vpack.c.bf16 %v719, %v719
        %v726 = vsel %vm493, %v724, 0
        %728 = vmatprep.subr.bf16.mxu0 0
        %729 = vmatpush1.bf16.msra.mxu0 %v726
        %730 = vmatprep.subr.bf16.mxu0 0
        %731 = vmatpush1.bf16.msra.mxu0 0
        %732 = vmatprep.subr.bf16.mxu0 0
        %733 = vmatpush1.bf16.msra.mxu0 0
        %734 = vmatprep.subr.bf16.mxu0 0
        %735 = vmatpush1.bf16.msra.mxu0 0
        %736 = vmatprep.subr.bf16.mxu0 0
        %737 = vmatpush1.bf16.msra.mxu0 0
        %738 = vmatprep.subr.bf16.mxu0 0
        %739 = vmatpush1.bf16.msra.mxu0 0
        %740 = vmatprep.subr.bf16.mxu0 0
        %741 = vmatpush1.bf16.msra.mxu0 0
        %742 = vmatprep.subr.bf16.mxu0 0
        %743 = vmatpush1.bf16.msra.mxu0 0
        %744 = vmatprep.subr.bf16.mxu0 0
        %745 = vmatpush1.bf16.msra.mxu0 0
        %746 = vmatprep.subr.bf16.mxu0 0
        %747 = vmatpush1.bf16.msra.mxu0 0
        %748 = vmatprep.subr.bf16.mxu0 0
        %749 = vmatpush1.bf16.msra.mxu0 0
        %750 = vmatprep.subr.bf16.mxu0 0
        %751 = vmatpush1.bf16.msra.mxu0 0
        %752 = vmatprep.subr.bf16.mxu0 0
        %753 = vmatpush1.bf16.msra.mxu0 0
        %754 = vmatprep.subr.bf16.mxu0 0
        %755 = vmatpush1.bf16.msra.mxu0 0
        %756 = vmatprep.subr.bf16.mxu0 0
        %757 = vmatpush1.bf16.msra.mxu0 0
        %758 = vmatprep.subr.bf16.mxu0 0
        %759 = vmatpush1.bf16.msra.mxu0 0
        %760 = vmatprep.mubr.bf16.mxu0 0
        %761 = vmatmul.mubr.bf16.gmra.mrb[0].mxu0 %v491
        %v762 = vpop.f32.mrb[0].mxu0
        %v763 = vadd.f32 0.0, %v762
        %v764 = vpop.f32.mrb[0].mxu0
        %v765 = vpop.f32.mrb[0].mxu0
        %v766 = vpop.f32.mrb[0].mxu0
        %767 = vdwg.mxu0
        %v768 = vmax.f32 %v763, 0.0
        %v769 = vadd.f32 %v768, %v542
        %v770 = vsel %vm444, %v769, 0.0
        %771 = vadd.xlane.f32.xlu0 %v770
        %v772 = vpop.xlane.xlu0 %771
        %v773 = vmul.f32 %v772, %v548
        %v774 = vsub.f32 %v769, %v773
        %v775 = vmul.f32 %v774, %v774
        %v776 = vsel %vm444, %v775, 0.0
        %777 = vadd.xlane.f32.xlu0 %v776
        %v778 = vpop.xlane.xlu0 %777
        %v779 = vmul.f32 %v778, %v548
        %v780 = vadd.f32 %v779, 1e-05
        %v781 = vrsqrt.pop %v780
        %v782 = vmul.f32 %v774, %v781
        %v783 = vmul.f32 %v782, %v563
        %v784 = vadd.f32 %v783, %v570
        %v785 = vadd.f32 %v784, %v679
        %v786 = vpack.c.bf16 %v785, %v785
        %v795 = vunpack.c.l.b16 %v408
        %v796 = vunpack.c.l.b16 %v409
        %v797 = vunpack.c.l.b16 %v410
        %v798 = vunpack.c.l.b16 %v411
        %v799 = vunpack.c.l.b16 %v412
        %v800 = vunpack.c.l.b16 %v413
        %v801 = vunpack.c.l.b16 %v414
        %v802 = vunpack.c.l.b16 %v415
        %v803 = vpack.c.b16 %v796, %v795
        %v804 = vpack.c.b16 %v798, %v797
        %v805 = vpack.c.b16 %v800, %v799
        %v806 = vpack.c.b16 %v802, %v801
        %v812 = vsel %vm444, %v786, 0
        %814 = vmatprep.subr.bf16.mxu0 0
        %815 = vmatpush1.bf16.msra.mxu0 %v803
        %816 = vmatprep.subr.bf16.mxu0 0
        %817 = vmatpush1.bf16.msra.mxu0 %v804
        %818 = vmatprep.subr.bf16.mxu0 0
        %819 = vmatpush1.bf16.msra.mxu0 %v805
        %820 = vmatprep.subr.bf16.mxu0 0
        %821 = vmatpush1.bf16.msra.mxu0 %v806
        %822 = vmatprep.subr.bf16.mxu0 0
        %823 = vmatpush1.bf16.msra.mxu0 0
        %824 = vmatprep.subr.bf16.mxu0 0
        %825 = vmatpush1.bf16.msra.mxu0 0
        %826 = vmatprep.subr.bf16.mxu0 0
        %827 = vmatpush1.bf16.msra.mxu0 0
        %828 = vmatprep.subr.bf16.mxu0 0
        %829 = vmatpush1.bf16.msra.mxu0 0
        %830 = vmatprep.subr.bf16.mxu0 0
        %831 = vmatpush1.bf16.msra.mxu0 0
        %832 = vmatprep.subr.bf16.mxu0 0
        %833 = vmatpush1.bf16.msra.mxu0 0
        %834 = vmatprep.subr.bf16.mxu0 0
        %835 = vmatpush1.bf16.msra.mxu0 0
        %836 = vmatprep.subr.bf16.mxu0 0
        %837 = vmatpush1.bf16.msra.mxu0 0
        %838 = vmatprep.subr.bf16.mxu0 0
        %839 = vmatpush1.bf16.msra.mxu0 0
        %840 = vmatprep.subr.bf16.mxu0 0
        %841 = vmatpush1.bf16.msra.mxu0 0
        %842 = vmatprep.subr.bf16.mxu0 0
        %843 = vmatpush1.bf16.msra.mxu0 0
        %844 = vmatprep.subr.bf16.mxu0 0
        %845 = vmatpush1.bf16.msra.mxu0 0
        %846 = vmatprep.mubr.bf16.mxu0 0
        %847 = vmatmul.mubr.bf16.gmra.mrb[0].mxu0 %v812
        %v848 = vpop.f32.mrb[0].mxu0
        %v849 = vadd.f32 0.0, %v848
        %v850 = vpop.f32.mrb[0].mxu0
        %v851 = vpop.f32.mrb[0].mxu0
        %v852 = vpop.f32.mrb[0].mxu0
        %853 = vdwg.mxu0
        %v854 = vpack.c.bf16 %v849, %v849
        %v856 = vlaneseq
        %v857 = vshrl.u32 %v856, 7
        %v858 = vsub.s32 0, %v857
        %v859 = vrot.slane %v398, %v858
        %v862 = vsel %vm444, %v854, 0
        %864 = vmatprep.subr.bf16.mxu0 0
        %865 = vmatpush1.bf16.xpose.msra.mxu0 %v812
        %866 = vmatprep.subr.bf16.mxu0 0
        %867 = vmatpush1.bf16.xpose.msra.mxu0 0
        %868 = vmatprep.subr.bf16.mxu0 0
        %869 = vmatpush1.bf16.xpose.msra.mxu0 0
        %870 = vmatprep.subr.bf16.mxu0 0
        %871 = vmatpush1.bf16.xpose.msra.mxu0 0
        %872 = vmatprep.subr.bf16.mxu0 0
        %873 = vmatpush1.bf16.xpose.msra.mxu0 0
        %874 = vmatprep.subr.bf16.mxu0 0
        %875 = vmatpush1.bf16.xpose.msra.mxu0 0
        %876 = vmatprep.subr.bf16.mxu0 0
        %877 = vmatpush1.bf16.xpose.msra.mxu0 0
        %878 = vmatprep.subr.bf16.mxu0 0
        %879 = vmatpush1.bf16.xpose.msra.mxu0 0
        %880 = vmatprep.subr.bf16.mxu0 0
        %881 = vmatpush1.bf16.xpose.msra.mxu0 0
        %882 = vmatprep.subr.bf16.mxu0 0
        %883 = vmatpush1.bf16.xpose.msra.mxu0 0
        %884 = vmatprep.subr.bf16.mxu0 0
        %885 = vmatpush1.bf16.xpose.msra.mxu0 0
        %886 = vmatprep.subr.bf16.mxu0 0
        %887 = vmatpush1.bf16.xpose.msra.mxu0 0
        %888 = vmatprep.subr.bf16.mxu0 0
        %889 = vmatpush1.bf16.xpose.msra.mxu0 0
        %890 = vmatprep.subr.bf16.mxu0 0
        %891 = vmatpush1.bf16.xpose.msra.mxu0 0
        %892 = vmatprep.subr.bf16.mxu0 0
        %893 = vmatpush1.bf16.xpose.msra.mxu0 0
        %894 = vmatprep.subr.bf16.mxu0 0
        %895 = vmatpush1.bf16.xpose.msra.mxu0 0
        %896 = vmatprep.mubr.bf16.mxu0 0
        %897 = vmatmul.mubr.bf16.gmra.mrb[0].mxu0 %v862
        %v898 = vpop.f32.mrb[0].mxu0
        %v899 = vadd.f32 %v859, %v898
        %v900 = vpop.f32.mrb[0].mxu0
        %v901 = vpop.f32.mrb[0].mxu0
        %v902 = vpop.f32.mrb[0].mxu0
        %903 = vdwg.mxu0
        %v904 = vsel %vm489, %v899, -inf
        %905 = vmax.xlane.f32.xlu0 %v904
        %v906 = vpop.xlane.xlu0 %905
        %v907 = vsub.f32 %v899, %v906
        %v908 = vmul.f32 %v907, 1.442695
        %v909 = vpow.pop %v908
        %v910 = vsel %vm489, %v909, 0.0
        %911 = vadd.xlane.f32.xlu0 %v910
        %v912 = vpop.xlane.xlu0 %911
        %v913 = vrcp.pop %v912
        %v914 = vmul.f32 %v909, %v913
        %v915 = vpack.c.bf16 %v914, %v914
        %v917 = vsel %vm489, %v915, 0
        %v919 = vsel %vm493, %v786, 0
        %921 = vmatprep.subr.bf16.mxu0 0
        %922 = vmatpush1.bf16.msra.mxu0 %v919
        %923 = vmatprep.subr.bf16.mxu0 0
        %924 = vmatpush1.bf16.msra.mxu0 0
        %925 = vmatprep.subr.bf16.mxu0 0
        %926 = vmatpush1.bf16.msra.mxu0 0
        %927 = vmatprep.subr.bf16.mxu0 0
        %928 = vmatpush1.bf16.msra.mxu0 0
        %929 = vmatprep.subr.bf16.mxu0 0
        %930 = vmatpush1.bf16.msra.mxu0 0
        %931 = vmatprep.subr.bf16.mxu0 0
        %932 = vmatpush1.bf16.msra.mxu0 0
        %933 = vmatprep.subr.bf16.mxu0 0
        %934 = vmatpush1.bf16.msra.mxu0 0
        %935 = vmatprep.subr.bf16.mxu0 0
        %936 = vmatpush1.bf16.msra.mxu0 0
        %937 = vmatprep.subr.bf16.mxu0 0
        %938 = vmatpush1.bf16.msra.mxu0 0
        %939 = vmatprep.subr.bf16.mxu0 0
        %940 = vmatpush1.bf16.msra.mxu0 0
        %941 = vmatprep.subr.bf16.mxu0 0
        %942 = vmatpush1.bf16.msra.mxu0 0
        %943 = vmatprep.subr.bf16.mxu0 0
        %944 = vmatpush1.bf16.msra.mxu0 0
        %945 = vmatprep.subr.bf16.mxu0 0
        %946 = vmatpush1.bf16.msra.mxu0 0
        %947 = vmatprep.subr.bf16.mxu0 0
        %948 = vmatpush1.bf16.msra.mxu0 0
        %949 = vmatprep.subr.bf16.mxu0 0
        %950 = vmatpush1.bf16.msra.mxu0 0
        %951 = vmatprep.subr.bf16.mxu0 0
        %952 = vmatpush1.bf16.msra.mxu0 0
        %953 = vmatprep.mubr.bf16.mxu0 0
        %954 = vmatmul.mubr.bf16.gmra.mrb[0].mxu0 %v917
        %v955 = vpop.f32.mrb[0].mxu0
        %v956 = vadd.f32 0.0, %v955
        %v957 = vpop.f32.mrb[0].mxu0
        %v958 = vpop.f32.mrb[0].mxu0
        %v959 = vpop.f32.mrb[0].mxu0
        %960 = vdwg.mxu0
        %962 = vset.pattern.permute.xlu0 0
        %963 = vperm.xlu0 %962, %v399
        %v964 = vpop.permute.xlu0 %963
        %v966 = vmul.f32 %v956, %v964
        %v968 = vlaneseq
        %v969 = vshrl.u32 %v968, 7
        %v970 = vsub.s32 0, %v969
        %v971 = vrot.slane %v419, %v970
        %v973 = vadd.f32 %v966, %v971
        %975 = vrot.lane.b32.xlu0 %v785, 64
        %v976 = vpop.permute.xlu0 %975
        %v978 = vsel %vm444, %v973, %v976
        %979 = vst [vmem:[%s389] sm:$0xff] %v978
        %s980 = sand.u32 %s203, 1
        %s981 = scalar_lea.sflag [#allocation4], %s980
        %s982 = sand.u32 %s203, 1
        %s983 = smul.addr %s982, 8
        %s984 = scalar_lea.vmem [#allocation10], %s983
        // Predicated region
        $region65: #{tpu_custom_call.1} parent=47 // pred_check
          %p985 = pneg %p213
        $region66: #{tpu_custom_call.1} parent=47 // pred_check_branch
          %987 = sbr.rel (%p985) target = $region68
        $region67: #{tpu_custom_call.1} parent=47 // pred_region
          %s989 = ssub.s32 128, 128
          %990 = vsyncadd %s981, %s989
          %s991 = smul.addr %s28, 128
          %s992 = scalar_lea.hbm %s7, %s991
          %s994 = sshll.u32 %s984, 4
          %s995 = int_to_ptr.vmem [resolvable:$true] %s994
          %997 = dma.vmem_to_hbm [thread:$0]  %s995, 128, %s992, %s981
        $region68: #{tpu_custom_call.1} parent=47 // pred_fallthru
          _
      $region48: #{tpu_custom_call.1} parent=5 // pred_fallthru
        _
      %p998 = scmp.le.s32.totalorder 2, %s23
      // Predicated region
      $region69: #{tpu_custom_call.1} parent=5 // pred_check
        %p999 = pneg %p998
      $region70: #{tpu_custom_call.1} parent=5 // pred_check_branch
        %1001 = sbr.rel (%p999) target = $region72
      $region71: #{tpu_custom_call.1} parent=5 // pred_region
        %s1002 = ssub.s32 %s23, 2
        // Predicated region
        $region73: #{tpu_custom_call.1} parent=71 // pred_check
          %p1003 = pneg %p219
        $region74: #{tpu_custom_call.1} parent=71 // pred_check_branch
          %1005 = sbr.rel (%p1003) target = $region76
        $region75: #{tpu_custom_call.1} parent=71 // pred_region
          %s1006 = sand.u32 %s204, 1
          %s1007 = scalar_lea.sflag [#allocation4], %s1006
          %s1008 = sand.u32 %s204, 1
          %s1009 = smul.addr %s1008, 8
          %s1010 = scalar_lea.vmem [#allocation10], %s1009
          %1011 = dma.done %s1007, 128
        $region76: #{tpu_custom_call.1} parent=71 // pred_fallthru
          _
      $region72: #{tpu_custom_call.1} parent=5 // pred_fallthru
        _
    $region6: #{tpu_custom_call.1} parent=1 // loop_footer
      %s27 = sadd.s32 1, %s23
    $region7: #{tpu_custom_call.1} parent=1 // loop_footer_branch
      %22 = sbr.rel target = $region3
    $region8: #{tpu_custom_call.1} parent=1 // loop_exit
      _
    %1012 = vsyncpa [#allocation3], 1
    %s1013 = scalar_lea.sflag [#allocation3], 1
    %1014 = vsyncpa %s1013, 1
    %1015 = vsyncpa [#allocation6], 1
    %s1016 = scalar_lea.sflag [#allocation6], 1
    %1017 = vsyncpa %s1016, 1
    %1018 = vsyncpa [#allocation9], 1
    %1019 = vsyncpa [#allocation4], 1
    %s1020 = scalar_lea.sflag [#allocation4], 1
    %1021 = vsyncpa %s1020, 1

</llo_original>
